<compile_context>
chip_gen: v5e
topology: v5e:2x2
jax: 0.10.0
libtpu: 0.0.40
codegen_flags: <defaults>
</compile_context>

<pallas_src>
import jax
import jax.numpy as jnp
from jax.experimental import pallas as pl
from jax.experimental.pallas import tpu as pltpu


def _conv_matmul_relu_kernel(x_ref, w_ref, o_ref):
    # x_ref: (TM, K)          im2col rows, bf16
    # w_ref: (K, C_out_pad)   flattened 3x3 weights, bf16 (resident across grid)
    # o_ref: (TM, C_out_pad)  lane-dense f32 output
    acc = jnp.dot(x_ref[...], w_ref[...], preferred_element_type=jnp.float32)
    o_ref[...] = jnp.maximum(acc, 0.0).astype(o_ref.dtype)


def basic_block_forward(x_nchw, weight_oihw, *, tm=256):
    """Conv2d(3x3, stride=1, pad=1, bias=False) + ReLU, matching PyTorch semantics.

    x_nchw:      (N, C_in, H, W)
    weight_oihw: (C_out, C_in, 3, 3)
    returns:     (N, C_out, H, W)
    """
    N, C_in, H, W = x_nchw.shape
    C_out = weight_oihw.shape[0]
    K = 9 * C_in

    # ---- one-time wrapper glue (fused by XLA, outside the hot kernel body) ----
    # NCHW -> NHWC, zero-pad spatially, im2col into (N*H*W, 9*C_in), cast to bf16.
    x_nhwc = jnp.transpose(x_nchw, (0, 2, 3, 1))
    x_pad = jnp.pad(x_nhwc, ((0, 0), (1, 1), (1, 1), (0, 0)))
    taps = [x_pad[:, dy:dy + H, dx:dx + W, :]
            for dy in range(3) for dx in range(3)]
    cols = jnp.concatenate(taps, axis=-1)                    # (N, H, W, 9*C_in)
    lhs = cols.reshape(N * H * W, K).astype(jnp.bfloat16)    # bf16 MXU operand

    # OIHW -> (dy, dx, C_in, C_out) -> (9*C_in, C_out); pad C_out to a full lane tile.
    w_flat = jnp.transpose(weight_oihw, (2, 3, 1, 0)).reshape(K, C_out)
    c_out_pad = ((C_out + 127) // 128) * 128
    rhs = jnp.pad(w_flat, ((0, 0), (0, c_out_pad - C_out))).astype(jnp.bfloat16)

    # Pad M (= N*H*W) up to a multiple of the row tile.
    m = N * H * W
    m_pad = pl.cdiv(m, tm) * tm
    lhs = jnp.pad(lhs, ((0, m_pad - m), (0, 0)))

    out = pl.pallas_call(
        _conv_matmul_relu_kernel,
        out_shape=jax.ShapeDtypeStruct((m_pad, c_out_pad), x_nchw.dtype),
        grid_spec=pltpu.PrefetchScalarGridSpec(
            num_scalar_prefetch=0,
            grid=(m_pad // tm,),
            in_specs=[
                pl.BlockSpec((tm, K), lambda i: (i, 0)),
                pl.BlockSpec((K, c_out_pad), lambda i: (0, 0)),
            ],
            out_specs=pl.BlockSpec((tm, c_out_pad), lambda i: (i, 0)),
        ),
        compiler_params=pltpu.CompilerParams(
            dimension_semantics=("parallel",)),
    )(lhs, rhs)

    # Un-pad and return NCHW to match the PyTorch module interface.
    out = out[:m, :C_out].reshape(N, H, W, C_out)
    return jnp.transpose(out, (0, 3, 1, 2))


if __name__ == "__main__":
    key = jax.random.PRNGKey(0)
    k_x, k_w = jax.random.split(key)

    # Small shapes consistent with the module: batch=2, ch_in=4, ch_out=8, spatial=16.
    N, C_in, C_out, H, W = 2, 4, 8, 16, 16
    x = jax.random.normal(k_x, (N, C_in, H, W), dtype=jnp.float32)
    weight = jax.random.normal(k_w, (C_out, C_in, 3, 3), dtype=jnp.float32) * 0.1

    out = jax.block_until_ready(basic_block_forward(x, weight))
    assert out.shape == (N, C_out, H, W)

    # Reference: same bf16-rounded operands, f32 accumulation (HIGHEST precision),
    # so the only difference vs the kernel is summation order.
    x_ref_in = x.astype(jnp.bfloat16).astype(jnp.float32)
    w_ref_in = weight.astype(jnp.bfloat16).astype(jnp.float32)
    ref = jax.lax.conv_general_dilated(
        x_ref_in, w_ref_in, window_strides=(1, 1), padding=((1, 1), (1, 1)),
        dimension_numbers=("NCHW", "OIHW", "NCHW"),
        precision=jax.lax.Precision.HIGHEST)
    ref = jnp.maximum(ref, 0.0)
    assert jnp.allclose(out, ref, atol=1e-3, rtol=1e-3)

    print("KERNEL_OK")
</pallas_src>

<mosaic_0001>
module attributes {stable_mosaic.version = 11 : i64} {
  func.func @_conv_matmul_relu_kernel(%arg0: i32, %arg1: memref<256x36xbf16, #tpu.memory_space<vmem>>, %arg2: memref<36x128xbf16, #tpu.memory_space<vmem>>, %arg3: memref<256x128xf32, #tpu.memory_space<vmem>>) attributes {dimension_semantics = [#tpu.dimension_semantics<parallel>], iteration_bounds = array<i64: 2>, scalar_prefetch = 0 : i64, scratch_operands = 0 : i64, tpu.core_type = #tpu.core_type<tc>, window_params = [{transform_indices = @transform_0, window_bounds = array<i64: 256, 36>}, {pipeline_mode = #tpu.pipeline_mode<synchronous>, transform_indices = @transform_1, window_bounds = array<i64: 36, 128>}, {transform_indices = @transform_2, window_bounds = array<i64: 256, 128>}]} {
    %c0 = arith.constant 0 : index
    %c0_0 = arith.constant 0 : index
    %0 = vector.load %arg1[%c0, %c0_0] : memref<256x36xbf16, #tpu.memory_space<vmem>>, vector<256x36xbf16>
    %c0_1 = arith.constant 0 : index
    %c0_2 = arith.constant 0 : index
    %1 = vector.load %arg2[%c0_1, %c0_2] : memref<36x128xbf16, #tpu.memory_space<vmem>>, vector<36x128xbf16>
    %cst = arith.constant dense<0.000000e+00> : vector<256x128xf32>
    %2 = tpu.matmul %0, %1, %cst {dimension_numbers = #tpu.dot_dimension_numbers<[1], [0], [0], [1], [0, 0, 1, 1], [], []>} : vector<256x36xbf16>, vector<36x128xbf16>, vector<256x128xf32> -> vector<256x128xf32>
    %cst_3 = arith.constant 0.000000e+00 : f32
    %3 = vector.broadcast %cst_3 : f32 to vector<256x128xf32>
    %4 = arith.maximumf %2, %3 : vector<256x128xf32>
    %c0_4 = arith.constant 0 : index
    %c0_5 = arith.constant 0 : index
    %5 = vector.load %arg3[%c0_4, %c0_5] : memref<256x128xf32, #tpu.memory_space<vmem>>, vector<256x128xf32>
    tpu.vector_store %arg3[%c0_4, %c0_5], %4 {strides = array<i32>} : memref<256x128xf32, #tpu.memory_space<vmem>>, vector<256x128xf32>,
    return
  }
  func.func @transform_0(%arg0: i32) -> (i32, i32) {
    %c0_i32 = arith.constant 0 : i32
    %c0_i32_0 = arith.constant 0 : i32
    return %arg0, %c0_i32 : i32, i32
  }
  func.func @transform_1(%arg0: i32) -> (i32, i32) {
    %c0_i32 = arith.constant 0 : i32
    %c0_i32_0 = arith.constant 0 : i32
    %c0_i32_1 = arith.constant 0 : i32
    return %c0_i32, %c0_i32_0 : i32, i32
  }
  func.func @transform_2(%arg0: i32) -> (i32, i32) {
    %c0_i32 = arith.constant 0 : i32
    %c0_i32_0 = arith.constant 0 : i32
    return %arg0, %c0_i32 : i32, i32
  }
}

</mosaic_0001>

<llo_original>
// kernel: tpu_custom_call.1
$region0: #{tpu_custom_call.1}
  #allocation0 [shape = 'u32[]', space=smem, size = 0x4, offset = 0x4, fixed_abs, tag = 'smem constant byte address 0x4 - core index']
  #allocation1 [shape = 'u32[72,128]{1,0:T(1,128)}', space=vmem, size = 0x9000, scoped, tag = 'internal scratch']
  %s0 = inlined_call_operand.vmem [shape: bf16[512,36], index: 0, kind: input, shape index: {}]
  %s1 = inlined_call_operand.vmem [shape: bf16[36,128], index: 1, kind: input, shape index: {}]
  %s2 = inlined_call_operand.hbm [shape: f32[512,128], index: 2, kind: output, shape index: {}]
  %s3 = sld [smem:[#allocation0]]
  $region41: #{tpu_custom_call.1} parent=0
    _
  %s5 = ssub.s32 1, %s3
  %s6 = scalar_select 0, %s5, %s3
  $region1: #{tpu_custom_call.1} parent=0
    #allocation2 [shape = 'u8[262144]{0}', space=vmem, size = 0x40000, scoped, tag = 'output window, operand 0']
    #allocation3 [shape = 's32[2]{0}', space=sflag, size = 0x8, scoped, tag = 'scoped memory for tpu_custom_call.1']
    %7 = vsyncpa [#allocation3], 0
    %s8 = scalar_lea.sflag [#allocation3], 1
    %9 = vsyncpa %s8, 0
    loop: start=0, step=1, limit=4
    $region2: #{tpu_custom_call.1} parent=1 // loop_pre_header
      _
    $region3: #{tpu_custom_call.1} parent=1 // loop_header
      %s11 = sphi 0, %s15
      %p12 = scmp.ge.s32.totalorder %s11, 4
      %s21 = sphi 0, %s23
      %s24 = sphi 0, %s21
      %s25 = sphi 0, %s24
      %s41 = sphi 0, %s25
      %s45 = sphi 0, %s45
      %s47 = sphi 0, %s45
      %s48 = sphi 0, %s47
      %s62 = sphi 0, %s48
      %s68 = sphi 0, %s70
      %s71 = sphi 0, %s68
      %s72 = sphi 0, %s71
      %s88 = sphi 0, %s72
    $region4: #{tpu_custom_call.1} parent=1 // loop_header_branch
      %14 = sbr.rel (%p12) target = $region8
    $region5: #{tpu_custom_call.1} parent=1 // loop_body
      %s16 = ssub.s32 %s11, 1
      %s17 = ssub.s32 %s11, 2
      %s18 = sadd.s32 %s11, 1
      %s19 = ssub.s32 %s11, %s18
      %p20 = scmp.eq.s32.totalorder %s19, 0
      %s22 = sadd.s32 %s21, 1
      %s23 = scalar_select %p20, %s21, %s22
      %p26 = pneg %p20
      %p27 = scmp.eq.s32.totalorder %s11, 1
      %p28 = por %p26, %p27
      %p29 = scmp.ne.s32.totalorder %s21, %s24
      %p30 = scmp.eq.s32.totalorder %s11, 0
      %p31 = por %p29, %p30
      %p32 = scmp.ne.s32.totalorder %s21, %s24
      %p33 = scmp.eq.s32.totalorder %s16, 1
      %p34 = por %p32, %p33
      %p35 = scmp.ne.s32.totalorder %s24, %s25
      %p36 = scmp.eq.s32.totalorder %s16, 0
      %p37 = por %p35, %p36
      %p38 = scmp.ne.s32.totalorder %s24, %s25
      %p39 = scmp.eq.s32.totalorder %s17, 1
      %p40 = por %p38, %p39
      %p42 = scmp.ne.s32.totalorder %s25, %s41
      %p43 = scmp.eq.s32.totalorder %s17, 0
      %p44 = por %p42, %p43
      %s46 = sadd.s32 %s45, 1
      %p49 = scmp.eq.s32.totalorder %s11, 1
      %p50 = scmp.ne.s32.totalorder %s45, %s47
      %p51 = scmp.eq.s32.totalorder %s11, 0
      %p52 = por %p50, %p51
      %p53 = scmp.ne.s32.totalorder %s45, %s47
      %p54 = scmp.eq.s32.totalorder %s16, 1
      %p55 = por %p53, %p54
      %p56 = scmp.ne.s32.totalorder %s47, %s48
      %p57 = scmp.eq.s32.totalorder %s16, 0
      %p58 = por %p56, %p57
      %p59 = scmp.ne.s32.totalorder %s47, %s48
      %p60 = scmp.eq.s32.totalorder %s17, 1
      %p61 = por %p59, %p60
      %p63 = scmp.ne.s32.totalorder %s48, %s62
      %p64 = scmp.eq.s32.totalorder %s17, 0
      %p65 = por %p63, %p64
      %s66 = ssub.s32 %s11, %s18
      %p67 = scmp.eq.s32.totalorder %s66, 0
      %s69 = sadd.s32 %s68, 1
      %s70 = scalar_select %p67, %s68, %s69
      %p73 = pneg %p67
      %p74 = scmp.eq.s32.totalorder %s11, 1
      %p75 = por %p73, %p74
      %p76 = scmp.ne.s32.totalorder %s68, %s71
      %p77 = scmp.eq.s32.totalorder %s11, 0
      %p78 = por %p76, %p77
      %p79 = scmp.ne.s32.totalorder %s68, %s71
      %p80 = scmp.eq.s32.totalorder %s16, 1
      %p81 = por %p79, %p80
      %p82 = scmp.ne.s32.totalorder %s71, %s72
      %p83 = scmp.eq.s32.totalorder %s16, 0
      %p84 = por %p82, %p83
      %p85 = scmp.ne.s32.totalorder %s71, %s72
      %p86 = scmp.eq.s32.totalorder %s17, 1
      %p87 = por %p85, %p86
      %p89 = scmp.ne.s32.totalorder %s72, %s88
      %p90 = scmp.eq.s32.totalorder %s17, 0
      %p91 = por %p89, %p90
      %p92 = scmp.le.s32.totalorder 1, %s11
      %p93 = scmp.lt.s32.totalorder %s11, 3
      %p94 = pnand %p92, %p93
      %p95 = pneg %p94
      // Predicated region
      $region9: #{tpu_custom_call.1} parent=5 // pred_check
        _
      $region10: #{tpu_custom_call.1} parent=5 // pred_check_branch
        %97 = sbr.rel (%p94) target = $region12
      $region11: #{tpu_custom_call.1} parent=5 // pred_region
        %s98 = ssub.s32 %s11, 1
        // Predicated region
        $region13: #{tpu_custom_call.1} parent=11 // pred_check
          %p99 = pneg %p58
        $region14: #{tpu_custom_call.1} parent=11 // pred_check_branch
          %101 = sbr.rel (%p99) target = $region16
        $region15: #{tpu_custom_call.1} parent=11 // pred_region
          _
        $region16: #{tpu_custom_call.1} parent=11 // pred_fallthru
          _
      $region12: #{tpu_custom_call.1} parent=5 // pred_fallthru
        _
      %p102 = scmp.lt.s32.totalorder %s11, 2
      // Predicated region
      $region17: #{tpu_custom_call.1} parent=5 // pred_check
        %p103 = pneg %p102
      $region18: #{tpu_custom_call.1} parent=5 // pred_check_branch
        %105 = sbr.rel (%p103) target = $region20
      $region19: #{tpu_custom_call.1} parent=5 // pred_region
        // Predicated region
        $region21: #{tpu_custom_call.1} parent=19 // pred_check
          %p106 = pneg %p31
        $region22: #{tpu_custom_call.1} parent=19 // pred_check_branch
          %108 = sbr.rel (%p106) target = $region24
        $region23: #{tpu_custom_call.1} parent=19 // pred_region
          %s109 = smul.u32 32, %s11
          %p110 = scmp.lt.s32.totalorder %s109, 63
          %s111 = scalar_select %p110, %s109, 63
          %s112 = smul.addr %s111, 4
          %s113 = scalar_lea.vmem %s0, %s112
          %s114 = smul.u32 32, %s11
        $region24: #{tpu_custom_call.1} parent=19 // pred_fallthru
          _
      $region20: #{tpu_custom_call.1} parent=5 // pred_fallthru
        _
      %p115 = scmp.le.s32.totalorder 1, %s11
      %p116 = scmp.lt.s32.totalorder %s11, 3
      %p117 = pnand %p115, %p116
      %p118 = pneg %p117
      // Predicated region
      $region25: #{tpu_custom_call.1} parent=5 // pred_check
        _
      $region26: #{tpu_custom_call.1} parent=5 // pred_check_branch
        %120 = sbr.rel (%p117) target = $region28
      $region27: #{tpu_custom_call.1} parent=5 // pred_region
        %s121 = ssub.s32 %s11, 1
        %s122 = smul.u32 32, %s16
        %p123 = scmp.lt.s32.totalorder %s122, 63
        %s124 = scalar_select %p123, %s122, 63
        %s125 = smul.addr %s124, 4
        %s126 = scalar_lea.vmem %s0, %s125
        %p127 = pneg %p37
        %p128 = pneg %p34
        %p129 = pneg %p58
        %p130 = pneg %p55
        %p131 = pneg %p84
        %p132 = pneg %p81
        %s133 = sand.u32 %s71, 1
        %s134 = scalar_lea.sflag [#allocation3], %s133
        %s135 = sand.u32 %s71, 1
        %s136 = smul.addr %s135, 256
        %s137 = scalar_lea.vmem [#allocation2], %s136
        %s138 = smul.u32 32, %s16
        %p139 = scmp.lt.s32.totalorder %s138, 63
        %s140 = scalar_select %p139, %s138, 63
        %s141 = smul.addr %s140, 4
        %s142 = scalar_lea.vmem %s0, %s141
        %s143 = smul.u32 32, %s16
        %s144 = smul.u32 32, %s16
        %v146 = vld [vmem:[%s142] sm:$0xf]
        %v147 = vld [vmem:[%s142 + $0x4] sm:$0xf]
        %v148 = vld [vmem:[%s142 + $0x8] sm:$0xf]
        %v149 = vld [vmem:[%s142 + $0xc] sm:$0xf]
        %v150 = vld [vmem:[%s142 + $0x10] sm:$0xf]
        %v151 = vld [vmem:[%s142 + $0x14] sm:$0xf]
        %v152 = vld [vmem:[%s142 + $0x18] sm:$0xf]
        %v153 = vld [vmem:[%s142 + $0x1c] sm:$0xf]
        %v154 = vld [vmem:[%s142 + $0x20] sm:$0xf]
        %v155 = vld [vmem:[%s142 + $0x24] sm:$0xf]
        %v156 = vld [vmem:[%s142 + $0x28] sm:$0xf]
        %v157 = vld [vmem:[%s142 + $0x2c] sm:$0xf]
        %v158 = vld [vmem:[%s142 + $0x30] sm:$0xf]
        %v159 = vld [vmem:[%s142 + $0x34] sm:$0xf]
        %v160 = vld [vmem:[%s142 + $0x38] sm:$0xf]
        %v161 = vld [vmem:[%s142 + $0x3c] sm:$0xf]
        %v162 = vld [vmem:[%s142 + $0x40] sm:$0xf]
        %v163 = vld [vmem:[%s142 + $0x44] sm:$0xf]
        %v164 = vld [vmem:[%s142 + $0x48] sm:$0xf]
        %v165 = vld [vmem:[%s142 + $0x4c] sm:$0xf]
        %v166 = vld [vmem:[%s142 + $0x50] sm:$0xf]
        %v167 = vld [vmem:[%s142 + $0x54] sm:$0xf]
        %v168 = vld [vmem:[%s142 + $0x58] sm:$0xf]
        %v169 = vld [vmem:[%s142 + $0x5c] sm:$0xf]
        %v170 = vld [vmem:[%s142 + $0x60] sm:$0xf]
        %v171 = vld [vmem:[%s142 + $0x64] sm:$0xf]
        %v172 = vld [vmem:[%s142 + $0x68] sm:$0xf]
        %v173 = vld [vmem:[%s142 + $0x6c] sm:$0xf]
        %v174 = vld [vmem:[%s142 + $0x70] sm:$0xf]
        %v175 = vld [vmem:[%s142 + $0x74] sm:$0xf]
        %v176 = vld [vmem:[%s142 + $0x78] sm:$0xf]
        %v177 = vld [vmem:[%s142 + $0x7c] sm:$0xf]
        %v178 = vld [vmem:[%s1] sm:$0xf]
        %v179 = vld [vmem:[%s1 + $0x4] sm:$0xf]
        %v180 = vld [vmem:[%s1 + $0x8] sm:$0xf]
        %v181 = vld [vmem:[%s1 + $0xc] sm:$0xf]
        %v182 = vld [vmem:[%s1 + $0x10] sm:$0x3]
        %v215 = vunpack.c.l.b16 %v146
        %v216 = vunpack.c.l.b16 %v147
        %v217 = vunpack.c.l.b16 %v148
        %v218 = vunpack.c.l.b16 %v149
        %v219 = vunpack.c.l.b16 %v150
        %v220 = vunpack.c.l.b16 %v151
        %v221 = vunpack.c.l.b16 %v152
        %v222 = vunpack.c.l.b16 %v153
        %v223 = vunpack.c.l.b16 %v154
        %v224 = vunpack.c.l.b16 %v155
        %v225 = vunpack.c.l.b16 %v156
        %v226 = vunpack.c.l.b16 %v157
        %v227 = vunpack.c.l.b16 %v158
        %v228 = vunpack.c.l.b16 %v159
        %v229 = vunpack.c.l.b16 %v160
        %v230 = vunpack.c.l.b16 %v161
        %v231 = vunpack.c.l.b16 %v162
        %v232 = vunpack.c.l.b16 %v163
        %v233 = vunpack.c.l.b16 %v164
        %v234 = vunpack.c.l.b16 %v165
        %v235 = vunpack.c.l.b16 %v166
        %v236 = vunpack.c.l.b16 %v167
        %v237 = vunpack.c.l.b16 %v168
        %v238 = vunpack.c.l.b16 %v169
        %v239 = vunpack.c.l.b16 %v170
        %v240 = vunpack.c.l.b16 %v171
        %v241 = vunpack.c.l.b16 %v172
        %v242 = vunpack.c.l.b16 %v173
        %v243 = vunpack.c.l.b16 %v174
        %v244 = vunpack.c.l.b16 %v175
        %v245 = vunpack.c.l.b16 %v176
        %v246 = vunpack.c.l.b16 %v177
        %v247 = vpack.c.b16 %v216, %v215
        %v248 = vpack.c.b16 %v218, %v217
        %v249 = vpack.c.b16 %v220, %v219
        %v250 = vpack.c.b16 %v222, %v221
        %v251 = vpack.c.b16 %v224, %v223
        %v252 = vpack.c.b16 %v226, %v225
        %v253 = vpack.c.b16 %v228, %v227
        %v254 = vpack.c.b16 %v230, %v229
        %v255 = vpack.c.b16 %v232, %v231
        %v256 = vpack.c.b16 %v234, %v233
        %v257 = vpack.c.b16 %v236, %v235
        %v258 = vpack.c.b16 %v238, %v237
        %v259 = vpack.c.b16 %v240, %v239
        %v260 = vpack.c.b16 %v242, %v241
        %v261 = vpack.c.b16 %v244, %v243
        %v262 = vpack.c.b16 %v246, %v245
        %v268 = vunpack.c.l.b16 %v178
        %v269 = vunpack.c.l.b16 %v179
        %v270 = vunpack.c.l.b16 %v180
        %v271 = vunpack.c.l.b16 %v181
        %v272 = vunpack.c.l.b16 %v182
        %v273 = vpack.c.b16 %v269, %v268
        %v274 = vpack.c.b16 %v271, %v270
        %v275 = vpack.c.b16 %v272, %v272
        %vm278 = vcmask 293888
        %v280 = vsel %vm278, %v247, 0
        %v283 = vsel %vm278, %v248, 0
        %v286 = vsel %vm278, %v249, 0
        %v289 = vsel %vm278, %v250, 0
        %v292 = vsel %vm278, %v251, 0
        %v295 = vsel %vm278, %v252, 0
        %v298 = vsel %vm278, %v253, 0
        %v301 = vsel %vm278, %v254, 0
        %v304 = vsel %vm278, %v255, 0
        %v307 = vsel %vm278, %v256, 0
        %v310 = vsel %vm278, %v257, 0
        %v313 = vsel %vm278, %v258, 0
        %v316 = vsel %vm278, %v259, 0
        %v319 = vsel %vm278, %v260, 0
        %v322 = vsel %vm278, %v261, 0
        %v325 = vsel %vm278, %v262, 0
        %vm327 = vcmask 1041408
        %v329 = vsel %vm327, %v275, 0
        %331 = vmatpush.bf16.msra.mxu0 0
        %332 = vmatpush.bf16.msra.mxu0 0
        %333 = vmatpush.bf16.msra.mxu0 0
        %334 = vmatpush.bf16.msra.mxu0 0
        %335 = vmatpush.bf16.msra.mxu0 0
        %336 = vmatpush.bf16.msra.mxu0 %v329
        %337 = vmatpush.bf16.msra.mxu0 %v274
        %338 = vmatpush.bf16.msra.mxu0 %v273
        %339 = vmatmul.bf16.gmra.mxu0 %v280
        %v340 = vpop.f32.mrf.mxu0
        %v341 = vadd.f32 0.0, %v340
        %v342 = vpop.f32.mrf.mxu0
        %v343 = vadd.f32 0.0, %v342
        %344 = vmatmul.bf16.gmra.mxu0 %v283
        %v345 = vpop.f32.mrf.mxu0
        %v346 = vadd.f32 0.0, %v345
        %v347 = vpop.f32.mrf.mxu0
        %v348 = vadd.f32 0.0, %v347
        %349 = vmatmul.bf16.gmra.mxu0 %v286
        %v350 = vpop.f32.mrf.mxu0
        %v351 = vadd.f32 0.0, %v350
        %v352 = vpop.f32.mrf.mxu0
        %v353 = vadd.f32 0.0, %v352
        %354 = vmatmul.bf16.gmra.mxu0 %v289
        %v355 = vpop.f32.mrf.mxu0
        %v356 = vadd.f32 0.0, %v355
        %v357 = vpop.f32.mrf.mxu0
        %v358 = vadd.f32 0.0, %v357
        %359 = vmatmul.bf16.gmra.mxu0 %v292
        %v360 = vpop.f32.mrf.mxu0
        %v361 = vadd.f32 0.0, %v360
        %v362 = vpop.f32.mrf.mxu0
        %v363 = vadd.f32 0.0, %v362
        %364 = vmatmul.bf16.gmra.mxu0 %v295
        %v365 = vpop.f32.mrf.mxu0
        %v366 = vadd.f32 0.0, %v365
        %v367 = vpop.f32.mrf.mxu0
        %v368 = vadd.f32 0.0, %v367
        %369 = vmatmul.bf16.gmra.mxu0 %v298
        %v370 = vpop.f32.mrf.mxu0
        %v371 = vadd.f32 0.0, %v370
        %v372 = vpop.f32.mrf.mxu0
        %v373 = vadd.f32 0.0, %v372
        %374 = vmatmul.bf16.gmra.mxu0 %v301
        %v375 = vpop.f32.mrf.mxu0
        %v376 = vadd.f32 0.0, %v375
        %v377 = vpop.f32.mrf.mxu0
        %v378 = vadd.f32 0.0, %v377
        %379 = vmatmul.bf16.gmra.mxu0 %v304
        %v380 = vpop.f32.mrf.mxu0
        %v381 = vadd.f32 0.0, %v380
        %v382 = vpop.f32.mrf.mxu0
        %v383 = vadd.f32 0.0, %v382
        %384 = vmatmul.bf16.gmra.mxu0 %v307
        %v385 = vpop.f32.mrf.mxu0
        %v386 = vadd.f32 0.0, %v385
        %v387 = vpop.f32.mrf.mxu0
        %v388 = vadd.f32 0.0, %v387
        %389 = vmatmul.bf16.gmra.mxu0 %v310
        %v390 = vpop.f32.mrf.mxu0
        %v391 = vadd.f32 0.0, %v390
        %v392 = vpop.f32.mrf.mxu0
        %v393 = vadd.f32 0.0, %v392
        %394 = vmatmul.bf16.gmra.mxu0 %v313
        %v395 = vpop.f32.mrf.mxu0
        %v396 = vadd.f32 0.0, %v395
        %v397 = vpop.f32.mrf.mxu0
        %v398 = vadd.f32 0.0, %v397
        %399 = vmatmul.bf16.gmra.mxu0 %v316
        %v400 = vpop.f32.mrf.mxu0
        %v401 = vadd.f32 0.0, %v400
        %v402 = vpop.f32.mrf.mxu0
        %v403 = vadd.f32 0.0, %v402
        %404 = vmatmul.bf16.gmra.mxu0 %v319
        %v405 = vpop.f32.mrf.mxu0
        %v406 = vadd.f32 0.0, %v405
        %v407 = vpop.f32.mrf.mxu0
        %v408 = vadd.f32 0.0, %v407
        %409 = vmatmul.bf16.gmra.mxu0 %v322
        %v410 = vpop.f32.mrf.mxu0
        %v411 = vadd.f32 0.0, %v410
        %v412 = vpop.f32.mrf.mxu0
        %v413 = vadd.f32 0.0, %v412
        %414 = vmatmul.bf16.gmra.mxu0 %v325
        %v415 = vpop.f32.mrf.mxu0
        %v416 = vadd.f32 0.0, %v415
        %v417 = vpop.f32.mrf.mxu0
        %v418 = vadd.f32 0.0, %v417
        %419 = vdwg.mxu0
        %v420 = vmax.f32 %v341, 0.0
        %v421 = vmax.f32 %v343, 0.0
        %v422 = vmax.f32 %v346, 0.0
        %v423 = vmax.f32 %v348, 0.0
        %v424 = vmax.f32 %v351, 0.0
        %v425 = vmax.f32 %v353, 0.0
        %v426 = vmax.f32 %v356, 0.0
        %v427 = vmax.f32 %v358, 0.0
        %v428 = vmax.f32 %v361, 0.0
        %v429 = vmax.f32 %v363, 0.0
        %v430 = vmax.f32 %v366, 0.0
        %v431 = vmax.f32 %v368, 0.0
        %v432 = vmax.f32 %v371, 0.0
        %v433 = vmax.f32 %v373, 0.0
        %v434 = vmax.f32 %v376, 0.0
        %v435 = vmax.f32 %v378, 0.0
        %v436 = vmax.f32 %v381, 0.0
        %v437 = vmax.f32 %v383, 0.0
        %v438 = vmax.f32 %v386, 0.0
        %v439 = vmax.f32 %v388, 0.0
        %v440 = vmax.f32 %v391, 0.0
        %v441 = vmax.f32 %v393, 0.0
        %v442 = vmax.f32 %v396, 0.0
        %v443 = vmax.f32 %v398, 0.0
        %v444 = vmax.f32 %v401, 0.0
        %v445 = vmax.f32 %v403, 0.0
        %v446 = vmax.f32 %v406, 0.0
        %v447 = vmax.f32 %v408, 0.0
        %v448 = vmax.f32 %v411, 0.0
        %v449 = vmax.f32 %v413, 0.0
        %v450 = vmax.f32 %v416, 0.0
        %v451 = vmax.f32 %v418, 0.0
        %452 = vst [vmem:[%s137] sm:$0xff] %v420
        %453 = vst [vmem:[%s137 + $0x8] sm:$0xff] %v421
        %454 = vst [vmem:[%s137 + $0x10] sm:$0xff] %v422
        %455 = vst [vmem:[%s137 + $0x18] sm:$0xff] %v423
        %456 = vst [vmem:[%s137 + $0x20] sm:$0xff] %v424
        %457 = vst [vmem:[%s137 + $0x28] sm:$0xff] %v425
        %458 = vst [vmem:[%s137 + $0x30] sm:$0xff] %v426
        %459 = vst [vmem:[%s137 + $0x38] sm:$0xff] %v427
        %460 = vst [vmem:[%s137 + $0x40] sm:$0xff] %v428
        %461 = vst [vmem:[%s137 + $0x48] sm:$0xff] %v429
        %462 = vst [vmem:[%s137 + $0x50] sm:$0xff] %v430
        %463 = vst [vmem:[%s137 + $0x58] sm:$0xff] %v431
        %464 = vst [vmem:[%s137 + $0x60] sm:$0xff] %v432
        %465 = vst [vmem:[%s137 + $0x68] sm:$0xff] %v433
        %466 = vst [vmem:[%s137 + $0x70] sm:$0xff] %v434
        %467 = vst [vmem:[%s137 + $0x78] sm:$0xff] %v435
        %468 = vst [vmem:[%s137 + $0x80] sm:$0xff] %v436
        %469 = vst [vmem:[%s137 + $0x88] sm:$0xff] %v437
        %470 = vst [vmem:[%s137 + $0x90] sm:$0xff] %v438
        %471 = vst [vmem:[%s137 + $0x98] sm:$0xff] %v439
        %472 = vst [vmem:[%s137 + $0xa0] sm:$0xff] %v440
        %473 = vst [vmem:[%s137 + $0xa8] sm:$0xff] %v441
        %474 = vst [vmem:[%s137 + $0xb0] sm:$0xff] %v442
        %475 = vst [vmem:[%s137 + $0xb8] sm:$0xff] %v443
        %476 = vst [vmem:[%s137 + $0xc0] sm:$0xff] %v444
        %477 = vst [vmem:[%s137 + $0xc8] sm:$0xff] %v445
        %478 = vst [vmem:[%s137 + $0xd0] sm:$0xff] %v446
        %479 = vst [vmem:[%s137 + $0xd8] sm:$0xff] %v447
        %480 = vst [vmem:[%s137 + $0xe0] sm:$0xff] %v448
        %481 = vst [vmem:[%s137 + $0xe8] sm:$0xff] %v449
        %482 = vst [vmem:[%s137 + $0xf0] sm:$0xff] %v450
        %483 = vst [vmem:[%s137 + $0xf8] sm:$0xff] %v451
        %s484 = sand.u32 %s71, 1
        %s485 = scalar_lea.sflag [#allocation3], %s484
        %s486 = sand.u32 %s71, 1
        %s487 = smul.addr %s486, 256
        %s488 = scalar_lea.vmem [#allocation2], %s487
        // Predicated region
        $region29: #{tpu_custom_call.1} parent=27 // pred_check
          %p489 = pneg %p81
        $region30: #{tpu_custom_call.1} parent=27 // pred_check_branch
          %491 = sbr.rel (%p489) target = $region32
        $region31: #{tpu_custom_call.1} parent=27 // pred_region
          %s492 = smul.u32 32, %s16
          %494 = vsyncadd %s485, 0
          %s495 = smul.addr %s492, 8
          %s496 = scalar_lea.hbm %s2, %s495
          %s497 = sshll.u32 %s488, 4
          %s498 = int_to_ptr.vmem [resolvable:$true] %s497
          %s499 = sshll.u32 %s496, 4
          %s500 = int_to_ptr.hbm [resolvable:$true] %s499
          %505 = dma.vmem_to_hbm [thread:$0]  %s498, 4096, %s500, %s485, 128, 128, 8
        $region32: #{tpu_custom_call.1} parent=27 // pred_fallthru
          _
      $region28: #{tpu_custom_call.1} parent=5 // pred_fallthru
        _
      %p506 = scmp.le.s32.totalorder 2, %s11
      // Predicated region
      $region33: #{tpu_custom_call.1} parent=5 // pred_check
        %p507 = pneg %p506
      $region34: #{tpu_custom_call.1} parent=5 // pred_check_branch
        %509 = sbr.rel (%p507) target = $region36
      $region35: #{tpu_custom_call.1} parent=5 // pred_region
        %s510 = ssub.s32 %s11, 2
        // Predicated region
        $region37: #{tpu_custom_call.1} parent=35 // pred_check
          %p511 = pneg %p87
        $region38: #{tpu_custom_call.1} parent=35 // pred_check_branch
          %513 = sbr.rel (%p511) target = $region40
        $region39: #{tpu_custom_call.1} parent=35 // pred_region
          %s514 = sand.u32 %s72, 1
          %s515 = scalar_lea.sflag [#allocation3], %s514
          %s516 = sand.u32 %s72, 1
          %s517 = smul.addr %s516, 256
          %s518 = scalar_lea.vmem [#allocation2], %s517
          %520 = dma.done %s515, 4096
        $region40: #{tpu_custom_call.1} parent=35 // pred_fallthru
          _
      $region36: #{tpu_custom_call.1} parent=5 // pred_fallthru
        _
    $region6: #{tpu_custom_call.1} parent=1 // loop_footer
      %s15 = sadd.s32 1, %s11
    $region7: #{tpu_custom_call.1} parent=1 // loop_footer_branch
      %10 = sbr.rel target = $region3
    $region8: #{tpu_custom_call.1} parent=1 // loop_exit
      _
    %521 = vsyncpa [#allocation3], 1
    %s522 = scalar_lea.sflag [#allocation3], 1
    %523 = vsyncpa %s522, 1

</llo_original>
